<compile_context>
chip_gen: v7x
topology: tpu7x:2x2x1
jax: 0.10.0
libtpu: 0.0.40
codegen_flags: <defaults>
</compile_context>

<pallas_src>
import functools

import jax
import jax.numpy as jnp
from jax.experimental import pallas as pl
from jax.experimental.pallas import tpu as pltpu

_INV_SQRT2 = 0.7071067811865476


def _erf(x, approx_recip):
    # Abramowitz & Stegun 7.1.26, |err| <= 1.5e-7. Elementwise only (VPU + EUP exp).
    ax = jnp.abs(x)
    denom = 1.0 + 0.3275911 * ax
    if approx_recip:
        t = pl.reciprocal(denom, approx=True)   # EUP slot (free-ish when VPU-bound)
    else:
        t = 1.0 / denom
    poly = t * (0.254829592
                + t * (-0.284496736
                       + t * (1.421413741
                              + t * (-1.453152027 + t * 1.061405429))))
    y = 1.0 - poly * jnp.exp(-ax * ax)
    return jnp.where(x >= 0.0, y, -y)


def _gelu_exact(x, approx_recip):
    return 0.5 * x * (1.0 + _erf(x * _INV_SQRT2, approx_recip))


def denoiser_kernel(lat_ref, cond_ref, tb_ref, w1l_ref, w1c_ref, w2_ref, b2_ref,
                    o_ref, *, approx_recip):
    lat = lat_ref[0]                                          # [tl, D] f32 (residual)
    # fc1 over cat([latent, cond, t], -1) == split dots against the pre-transposed
    # weight slices; the per-batch-constant time contribution (+ fc1.bias) arrives
    # as the precomputed bias row tb_ref.  No in-kernel concat / transpose.
    h = (jnp.dot(lat.astype(w1l_ref.dtype), w1l_ref[...],
                 preferred_element_type=jnp.float32)
         + jnp.dot(cond_ref[0], w1c_ref[...], preferred_element_type=jnp.float32)
         + tb_ref[0])                                         # [1, D] broadcast add
    h = _gelu_exact(h, approx_recip)                          # exact (erf) GELU, f32
    y = jnp.dot(h.astype(w2_ref.dtype), w2_ref[...],
                preferred_element_type=jnp.float32) + b2_ref[...]
    o_ref[0] = (lat + y).astype(o_ref.dtype)                  # residual add in f32


def _round_up(x, m):
    return ((x + m - 1) // m) * m


def _choose_l_tiling(L, B, row_tile_cap):
    """Pick (tile_rows, num_tiles, padded_L). Tiles are multiples of 8 (sublanes)
    unless a single tile covers the full, un-padded L."""
    cap = max(8, (int(row_tile_cap) // 8) * 8)
    if L > cap:
        tl = cap
    elif B == 1 and L >= 16:
        # v7x has 2 TensorCores: keep >= 2 parallel grid tiles when batch == 1.
        tl = _round_up((L + 1) // 2, 8)
    else:
        tl = L   # one tile == full dim, so the (8,128) rule is satisfied trivially
    nL = -(-L // tl)
    return tl, nL, nL * tl


def denoiser_forward(latent, cond, t_embed, params, *,
                     compute_dtype=jnp.bfloat16, row_tile=4096, approx_recip=None):
    """params = (fc1_w [D, D+C+T], fc1_b [D], fc2_w [D, D], fc2_b [D]) in PyTorch layout."""
    B, L, D = latent.shape
    C = cond.shape[-1]
    T = t_embed.shape[-1]
    fc1_w, fc1_b, fc2_w, fc2_b = params
    if approx_recip is None:
        approx_recip = (jnp.dtype(compute_dtype) == jnp.dtype(jnp.bfloat16))

    # ---- host-side packing (layout plumbing only) ----
    w1_t = fc1_w.T                                   # [D+C+T, D]
    w1l = w1_t[:D].astype(compute_dtype)             # [D, D] latent slice
    w1c = w1_t[D:D + C].astype(compute_dtype)        # [C, D] cond slice
    w1t = w1_t[D + C:].astype(jnp.float32)           # [T, D] time slice (host-only)
    w2 = fc2_w.T.astype(compute_dtype)               # [D, D]
    b2 = fc2_b.reshape(1, D).astype(jnp.float32)

    # Per-batch constant fc1 contribution of the broadcast time embedding, folded
    # with fc1.bias -> tiny [B, 1, D] bias (replaces the [B*L, T] broadcast input).
    t_bias = (t_embed[:, 0, :].astype(jnp.float32) @ w1t
              + fc1_b.reshape(1, D).astype(jnp.float32)).reshape(B, 1, D)

    lat_f = latent.astype(jnp.float32)               # kept f32: exact residual path
    cond_c = cond.astype(compute_dtype)

    # ---- L tiling with ragged-tail padding ----
    tl, nL, Lp = _choose_l_tiling(L, B, row_tile)
    if Lp != L:
        pad = ((0, 0), (0, Lp - L), (0, 0))
        lat_f = jnp.pad(lat_f, pad)
        cond_c = jnp.pad(cond_c, pad)

    grid = (B, nL)
    kernel = functools.partial(denoiser_kernel, approx_recip=approx_recip)

    M = B * L
    isz = jnp.dtype(compute_dtype).itemsize
    cost = pl.CostEstimate(
        flops=int(2 * M * D * (2 * D + C) + 30 * M * D),
        transcendentals=int(M * D),
        bytes_accessed=int(M * (4 * D + isz * C + 4 * D)
                           + isz * (2 * D * D + C * D) + 4 * D * (B + 1)),
    )

    out = pl.pallas_call(
        kernel,
        out_shape=jax.ShapeDtypeStruct((B, Lp, D), latent.dtype),
        grid=grid,
        in_specs=[
            pl.BlockSpec((1, tl, D), lambda b, j: (b, j, 0)),   # latent rows (f32)
            pl.BlockSpec((1, tl, C), lambda b, j: (b, j, 0)),   # cond rows
            pl.BlockSpec((1, 1, D), lambda b, j: (b, 0, 0)),    # per-batch t bias
            pl.BlockSpec((D, D), lambda b, j: (0, 0)),          # w1 latent slice
            pl.BlockSpec((C, D), lambda b, j: (0, 0)),          # w1 cond slice
            pl.BlockSpec((D, D), lambda b, j: (0, 0)),          # w2
            pl.BlockSpec((1, D), lambda b, j: (0, 0)),          # b2
        ],
        out_specs=pl.BlockSpec((1, tl, D), lambda b, j: (b, j, 0)),
        compiler_params=pltpu.CompilerParams(
            dimension_semantics=("parallel", "parallel"),
            vmem_limit_bytes=32 * 1024 * 1024),
        cost_estimate=cost,
    )(lat_f, cond_c, t_bias, w1l, w1c, w2, b2)

    if Lp != L:
        out = out[:, :L, :]
    return out


# ---------------- plain-JAX reference (correctness check) ----------------
def reference(latent, cond, t_embed, params):
    fc1_w, fc1_b, fc2_w, fc2_b = params
    B, L, _ = latent.shape
    t = jnp.broadcast_to(t_embed, (B, L, t_embed.shape[-1]))
    x = jnp.concatenate([latent, cond, t], axis=-1)
    x = jax.nn.gelu(x @ fc1_w.T + fc1_b, approximate=False)   # exact GELU
    return latent + (x @ fc2_w.T + fc2_b)


if __name__ == "__main__":
    B, L = 2, 8
    latent_dim, cond_dim, time_dim = 32, 32, 16
    D, C, T = latent_dim, cond_dim, time_dim

    key = jax.random.PRNGKey(0)
    k = iter(jax.random.split(key, 16))

    latent = jax.random.normal(next(k), (B, L, D), dtype=jnp.float32)
    cond = jax.random.normal(next(k), (B, L, C), dtype=jnp.float32)
    t_embed = jax.random.normal(next(k), (B, 1, T), dtype=jnp.float32)

    params = (
        (0.05 * jax.random.normal(next(k), (D, D + C + T))).astype(jnp.float32),  # fc1.w
        (0.05 * jax.random.normal(next(k), (D,))).astype(jnp.float32),            # fc1.b
        (0.05 * jax.random.normal(next(k), (D, D))).astype(jnp.float32),          # fc2.w
        (0.05 * jax.random.normal(next(k), (D,))).astype(jnp.float32),            # fc2.b
    )

    ref = jax.block_until_ready(reference(latent, cond, t_embed, params))

    # (1) strict f32 storage path: tight parity with the exact-GELU reference.
    out_f32 = jax.block_until_ready(
        denoiser_forward(latent, cond, t_embed, params,
                         compute_dtype=jnp.float32, approx_recip=False))
    assert out_f32.shape == (B, L, D)
    err_f32 = float(jnp.max(jnp.abs(out_f32 - ref)))
    assert err_f32 < 1e-4, err_f32

    # (2) default bf16-storage path (f32 accumulation / GELU / residual).
    out_bf16 = jax.block_until_ready(denoiser_forward(latent, cond, t_embed, params))
    err_bf16 = float(jnp.max(jnp.abs(out_bf16 - ref)))
    assert err_bf16 < 3e-2, err_bf16

    # (3) ragged L with batch == 1: exercises tile split + zero-padded tail.
    B2, L2 = 1, 20
    latent2 = jax.random.normal(next(k), (B2, L2, D), dtype=jnp.float32)
    cond2 = jax.random.normal(next(k), (B2, L2, C), dtype=jnp.float32)
    temb2 = jax.random.normal(next(k), (B2, 1, T), dtype=jnp.float32)
    ref2 = jax.block_until_ready(reference(latent2, cond2, temb2, params))
    out2 = jax.block_until_ready(
        denoiser_forward(latent2, cond2, temb2, params,
                         compute_dtype=jnp.float32, approx_recip=False))
    assert out2.shape == (B2, L2, D)
    err2 = float(jnp.max(jnp.abs(out2 - ref2)))
    assert err2 < 1e-4, err2

    print("KERNEL_OK")
</pallas_src>

<mosaic_0001>
module attributes {stable_mosaic.version = 11 : i64} {
  func.func @denoiser_kernel(%arg0: i32, %arg1: i32, %arg2: memref<1x8x32xf32, #tpu.memory_space<vmem>>, %arg3: memref<1x8x32xf32, #tpu.memory_space<vmem>>, %arg4: memref<1x1x32xf32, #tpu.memory_space<vmem>>, %arg5: memref<32x32xf32, #tpu.memory_space<vmem>>, %arg6: memref<32x32xf32, #tpu.memory_space<vmem>>, %arg7: memref<32x32xf32, #tpu.memory_space<vmem>>, %arg8: memref<1x32xf32, #tpu.memory_space<vmem>>, %arg9: memref<1x8x32xf32, #tpu.memory_space<vmem>>) attributes {dimension_semantics = [#tpu.dimension_semantics<parallel>, #tpu.dimension_semantics<parallel>], iteration_bounds = array<i64: 2, 1>, scalar_prefetch = 0 : i64, scratch_operands = 0 : i64, tpu.core_type = #tpu.core_type<tc>, window_params = [{transform_indices = @transform_0, window_bounds = array<i64: 1, 8, 32>}, {transform_indices = @transform_1, window_bounds = array<i64: 1, 8, 32>}, {transform_indices = @transform_2, window_bounds = array<i64: 1, 1, 32>}, {pipeline_mode = #tpu.pipeline_mode<synchronous>, transform_indices = @transform_3, window_bounds = array<i64: 32, 32>}, {pipeline_mode = #tpu.pipeline_mode<synchronous>, transform_indices = @transform_4, window_bounds = array<i64: 32, 32>}, {pipeline_mode = #tpu.pipeline_mode<synchronous>, transform_indices = @transform_5, window_bounds = array<i64: 32, 32>}, {pipeline_mode = #tpu.pipeline_mode<synchronous>, transform_indices = @transform_6, window_bounds = array<i64: 1, 32>}, {transform_indices = @transform_7, window_bounds = array<i64: 1, 8, 32>}]} {
    %c0 = arith.constant 0 : index
    %c0_0 = arith.constant 0 : index
    %c0_1 = arith.constant 0 : index
    %0 = vector.load %arg2[%c0, %c0_0, %c0_1] : memref<1x8x32xf32, #tpu.memory_space<vmem>>, vector<1x8x32xf32>
    %1 = vector.shape_cast %0 : vector<1x8x32xf32> to vector<8x32xf32>
    %c0_2 = arith.constant 0 : index
    %c0_3 = arith.constant 0 : index
    %2 = vector.load %arg5[%c0_2, %c0_3] : memref<32x32xf32, #tpu.memory_space<vmem>>, vector<32x32xf32>
    %cst = arith.constant dense<0.000000e+00> : vector<8x32xf32>
    %3 = tpu.matmul %1, %2, %cst {dimension_numbers = #tpu.dot_dimension_numbers<[1], [0], [0], [1], [0, 0, 1, 1], [], []>} : vector<8x32xf32>, vector<32x32xf32>, vector<8x32xf32> -> vector<8x32xf32>
    %c0_4 = arith.constant 0 : index
    %c0_5 = arith.constant 0 : index
    %c0_6 = arith.constant 0 : index
    %4 = vector.load %arg3[%c0_4, %c0_5, %c0_6] : memref<1x8x32xf32, #tpu.memory_space<vmem>>, vector<1x8x32xf32>
    %5 = vector.shape_cast %4 : vector<1x8x32xf32> to vector<8x32xf32>
    %c0_7 = arith.constant 0 : index
    %c0_8 = arith.constant 0 : index
    %6 = vector.load %arg6[%c0_7, %c0_8] : memref<32x32xf32, #tpu.memory_space<vmem>>, vector<32x32xf32>
    %cst_9 = arith.constant dense<0.000000e+00> : vector<8x32xf32>
    %7 = tpu.matmul %5, %6, %cst_9 {dimension_numbers = #tpu.dot_dimension_numbers<[1], [0], [0], [1], [0, 0, 1, 1], [], []>} : vector<8x32xf32>, vector<32x32xf32>, vector<8x32xf32> -> vector<8x32xf32>
    %8 = arith.addf %3, %7 : vector<8x32xf32>
    %c0_10 = arith.constant 0 : index
    %c0_11 = arith.constant 0 : index
    %c0_12 = arith.constant 0 : index
    %9 = vector.load %arg4[%c0_10, %c0_11, %c0_12] : memref<1x1x32xf32, #tpu.memory_space<vmem>>, vector<1x1x32xf32>
    %10 = vector.shape_cast %9 : vector<1x1x32xf32> to vector<1x32xf32>
    %11 = vector.broadcast %10 : vector<1x32xf32> to vector<8x32xf32>
    %12 = arith.addf %8, %11 : vector<8x32xf32>
    %cst_13 = arith.constant 5.000000e-01 : f32
    %13 = vector.broadcast %cst_13 : f32 to vector<8x32xf32>
    %14 = arith.mulf %13, %12 : vector<8x32xf32>
    %cst_14 = arith.constant 0.707106769 : f32
    %15 = vector.broadcast %cst_14 : f32 to vector<8x32xf32>
    %16 = arith.mulf %12, %15 : vector<8x32xf32>
    %17 = math.absf %16 : vector<8x32xf32>
    %cst_15 = arith.constant 0.327591091 : f32
    %18 = vector.broadcast %cst_15 : f32 to vector<8x32xf32>
    %19 = arith.mulf %18, %17 : vector<8x32xf32>
    %cst_16 = arith.constant 1.000000e+00 : f32
    %20 = vector.broadcast %cst_16 : f32 to vector<8x32xf32>
    %21 = arith.addf %20, %19 : vector<8x32xf32>
    %cst_17 = arith.constant 1.000000e+00 : f32
    %22 = vector.broadcast %cst_17 : f32 to vector<8x32xf32>
    %23 = arith.divf %22, %21 : vector<8x32xf32>
    %cst_18 = arith.constant 1.06140542 : f32
    %24 = vector.broadcast %cst_18 : f32 to vector<8x32xf32>
    %25 = arith.mulf %23, %24 : vector<8x32xf32>
    %cst_19 = arith.constant -1.45315206 : f32
    %26 = vector.broadcast %cst_19 : f32 to vector<8x32xf32>
    %27 = arith.addf %26, %25 : vector<8x32xf32>
    %28 = arith.mulf %23, %27 : vector<8x32xf32>
    %cst_20 = arith.constant 1.42141378 : f32
    %29 = vector.broadcast %cst_20 : f32 to vector<8x32xf32>
    %30 = arith.addf %29, %28 : vector<8x32xf32>
    %31 = arith.mulf %23, %30 : vector<8x32xf32>
    %cst_21 = arith.constant -0.284496725 : f32
    %32 = vector.broadcast %cst_21 : f32 to vector<8x32xf32>
    %33 = arith.addf %32, %31 : vector<8x32xf32>
    %34 = arith.mulf %23, %33 : vector<8x32xf32>
    %cst_22 = arith.constant 0.254829586 : f32
    %35 = vector.broadcast %cst_22 : f32 to vector<8x32xf32>
    %36 = arith.addf %35, %34 : vector<8x32xf32>
    %37 = arith.mulf %23, %36 : vector<8x32xf32>
    %cst_23 = arith.constant 0.000000e+00 : f32
    %38 = vector.broadcast %cst_23 : f32 to vector<8x32xf32>
    %39 = arith.subf %38, %17 : vector<8x32xf32>
    %40 = arith.mulf %39, %17 : vector<8x32xf32>
    %41 = math.exp %40 : vector<8x32xf32>
    %42 = arith.mulf %37, %41 : vector<8x32xf32>
    %cst_24 = arith.constant 1.000000e+00 : f32
    %43 = vector.broadcast %cst_24 : f32 to vector<8x32xf32>
    %44 = arith.subf %43, %42 : vector<8x32xf32>
    %cst_25 = arith.constant 0.000000e+00 : f32
    %45 = vector.broadcast %cst_25 : f32 to vector<8x32xf32>
    %46 = arith.cmpf oge, %16, %45 : vector<8x32xf32>
    %cst_26 = arith.constant 0.000000e+00 : f32
    %47 = vector.broadcast %cst_26 : f32 to vector<8x32xf32>
    %48 = arith.subf %47, %44 : vector<8x32xf32>
    %49 = arith.select %46, %44, %48 : vector<8x32xi1>, vector<8x32xf32>
    %cst_27 = arith.constant 1.000000e+00 : f32
    %50 = vector.broadcast %cst_27 : f32 to vector<8x32xf32>
    %51 = arith.addf %50, %49 : vector<8x32xf32>
    %52 = arith.mulf %14, %51 : vector<8x32xf32>
    %c0_28 = arith.constant 0 : index
    %c0_29 = arith.constant 0 : index
    %53 = vector.load %arg7[%c0_28, %c0_29] : memref<32x32xf32, #tpu.memory_space<vmem>>, vector<32x32xf32>
    %cst_30 = arith.constant dense<0.000000e+00> : vector<8x32xf32>
    %54 = tpu.matmul %52, %53, %cst_30 {dimension_numbers = #tpu.dot_dimension_numbers<[1], [0], [0], [1], [0, 0, 1, 1], [], []>} : vector<8x32xf32>, vector<32x32xf32>, vector<8x32xf32> -> vector<8x32xf32>
    %c0_31 = arith.constant 0 : index
    %c0_32 = arith.constant 0 : index
    %55 = vector.load %arg8[%c0_31, %c0_32] : memref<1x32xf32, #tpu.memory_space<vmem>>, vector<1x32xf32>
    %56 = vector.broadcast %55 : vector<1x32xf32> to vector<8x32xf32>
    %57 = arith.addf %54, %56 : vector<8x32xf32>
    %58 = arith.addf %1, %57 : vector<8x32xf32>
    %c0_33 = arith.constant 0 : index
    %c0_34 = arith.constant 0 : index
    %c0_35 = arith.constant 0 : index
    %59 = vector.load %arg9[%c0_33, %c0_34, %c0_35] : memref<1x8x32xf32, #tpu.memory_space<vmem>>, vector<1x8x32xf32>
    %60 = vector.shape_cast %59 : vector<1x8x32xf32> to vector<8x32xf32>
    %61 = vector.shape_cast %58 : vector<8x32xf32> to vector<1x8x32xf32>
    tpu.vector_store %arg9[%c0_33, %c0_34, %c0_35], %61 {strides = array<i32>} : memref<1x8x32xf32, #tpu.memory_space<vmem>>, vector<1x8x32xf32>,
    return
  }
  func.func @transform_0(%arg0: i32, %arg1: i32) -> (i32, i32, i32) {
    %c0_i32 = arith.constant 0 : i32
    %c0_i32_0 = arith.constant 0 : i32
    return %arg0, %arg1, %c0_i32 : i32, i32, i32
  }
  func.func @transform_1(%arg0: i32, %arg1: i32) -> (i32, i32, i32) {
    %c0_i32 = arith.constant 0 : i32
    %c0_i32_0 = arith.constant 0 : i32
    return %arg0, %arg1, %c0_i32 : i32, i32, i32
  }
  func.func @transform_2(%arg0: i32, %arg1: i32) -> (i32, i32, i32) {
    %c0_i32 = arith.constant 0 : i32
    %c0_i32_0 = arith.constant 0 : i32
    %c0_i32_1 = arith.constant 0 : i32
    return %arg0, %c0_i32, %c0_i32_0 : i32, i32, i32
  }
  func.func @transform_3(%arg0: i32, %arg1: i32) -> (i32, i32) {
    %c0_i32 = arith.constant 0 : i32
    %c0_i32_0 = arith.constant 0 : i32
    %c0_i32_1 = arith.constant 0 : i32
    return %c0_i32, %c0_i32_0 : i32, i32
  }
  func.func @transform_4(%arg0: i32, %arg1: i32) -> (i32, i32) {
    %c0_i32 = arith.constant 0 : i32
    %c0_i32_0 = arith.constant 0 : i32
    %c0_i32_1 = arith.constant 0 : i32
    return %c0_i32, %c0_i32_0 : i32, i32
  }
  func.func @transform_5(%arg0: i32, %arg1: i32) -> (i32, i32) {
    %c0_i32 = arith.constant 0 : i32
    %c0_i32_0 = arith.constant 0 : i32
    %c0_i32_1 = arith.constant 0 : i32
    return %c0_i32, %c0_i32_0 : i32, i32
  }
  func.func @transform_6(%arg0: i32, %arg1: i32) -> (i32, i32) {
    %c0_i32 = arith.constant 0 : i32
    %c0_i32_0 = arith.constant 0 : i32
    %c0_i32_1 = arith.constant 0 : i32
    return %c0_i32, %c0_i32_0 : i32, i32
  }
  func.func @transform_7(%arg0: i32, %arg1: i32) -> (i32, i32, i32) {
    %c0_i32 = arith.constant 0 : i32
    %c0_i32_0 = arith.constant 0 : i32
    return %arg0, %arg1, %c0_i32 : i32, i32, i32
  }
}

</mosaic_0001>

<llo_original>
// kernel: tpu_custom_call.1
$region0: #{tpu_custom_call.1}
  #allocation0 [shape = 'u32[]', space=smem, size = 0x4, offset = 0x4, fixed_abs, tag = 'smem constant byte address 0x4 - core index']
  #allocation1 [shape = 'u32[144,128]{1,0:T(1,128)}', space=vmem, size = 0x12000, scoped, tag = 'internal scratch']
  %s0 = inlined_call_operand.hbm [shape: f32[2,8,32], index: 0, kind: input, shape index: {}]
  %s1 = inlined_call_operand.hbm [shape: f32[2,8,32], index: 1, kind: input, shape index: {}]
  %s2 = inlined_call_operand.vmem [shape: f32[2,1,32], index: 2, kind: input, shape index: {}]
  %s3 = inlined_call_operand.hbm [shape: f32[32,32], index: 3, kind: input, shape index: {}]
  %s4 = inlined_call_operand.hbm [shape: f32[32,32], index: 4, kind: input, shape index: {}]
  %s5 = inlined_call_operand.hbm [shape: f32[32,32], index: 5, kind: input, shape index: {}]
  %s6 = inlined_call_operand.vmem [shape: f32[1,32], index: 6, kind: input, shape index: {}]
  %s7 = inlined_call_operand.hbm [shape: f32[2,8,32], index: 7, kind: output, shape index: {}]
  %s8 = sld [smem:[#allocation0]]
  $region81: #{tpu_custom_call.1} parent=0
    _
  %s10 = ssub.s32 1, %s8
  %s11 = scalar_select 0, %s10, %s8
  $region1: #{tpu_custom_call.1} parent=0
    #allocation2 [shape = 'u8[8192]{0}', space=vmem, size = 0x2000, scoped, tag = 'input window, operand 0']
    #allocation3 [shape = 's32[2]{0}', space=sflag, size = 0x8, scoped, tag = 'scoped memory for tpu_custom_call.1']
    #allocation4 [shape = 's32[2]{0}', space=sflag, size = 0x8, scoped, tag = 'scoped memory for tpu_custom_call.1']
    #allocation5 [shape = 'u8[8192]{0}', space=vmem, size = 0x2000, scoped, tag = 'input window, operand 1']
    #allocation6 [shape = 's32[2]{0}', space=sflag, size = 0x8, scoped, tag = 'scoped memory for tpu_custom_call.1']
    #allocation7 [shape = 'u8[16384]{0}', space=vmem, size = 0x4000, scoped, tag = 'input window, operand 3, single buffered']
    #allocation8 [shape = 'u8[16384]{0}', space=vmem, size = 0x4000, scoped, tag = 'input window, operand 4, single buffered']
    #allocation9 [shape = 's32[1]{0}', space=sflag, size = 0x4, scoped, tag = 'scoped memory for tpu_custom_call.1']
    #allocation10 [shape = 'u8[16384]{0}', space=vmem, size = 0x4000, scoped, tag = 'input window, operand 5, single buffered']
    #allocation11 [shape = 'u8[8192]{0}', space=vmem, size = 0x2000, scoped, tag = 'output window, operand 0']
    %12 = vsyncpa [#allocation3], 0
    %s13 = scalar_lea.sflag [#allocation3], 1
    %14 = vsyncpa %s13, 0
    %15 = vsyncpa [#allocation6], 0
    %s16 = scalar_lea.sflag [#allocation6], 1
    %17 = vsyncpa %s16, 0
    %18 = vsyncpa [#allocation9], 0
    %19 = vsyncpa [#allocation4], 0
    %s20 = scalar_lea.sflag [#allocation4], 1
    %21 = vsyncpa %s20, 0
    loop: start=0, step=1, limit=4
    $region2: #{tpu_custom_call.1} parent=1 // loop_pre_header
      _
    $region3: #{tpu_custom_call.1} parent=1 // loop_header
      %s23 = sphi 0, %s27
      %p24 = scmp.ge.s32.totalorder %s23, 4
      %s30 = sphi 0, %s42
      %s31 = sphi 0, %s38
      %s32 = sphi 0, %s30
      %s33 = sphi 0, %s31
      %s34 = sphi 0, %s32
      %s35 = sphi 0, %s33
      %s47 = sphi 0, %s49
      %s50 = sphi 0, %s47
      %s51 = sphi 0, %s50
      %s67 = sphi 0, %s51
      %s75 = sphi 0, %s77
      %s78 = sphi 0, %s75
      %s79 = sphi 0, %s78
      %s95 = sphi 0, %s79
      %s101 = sphi 0, %s103
      %s104 = sphi 0, %s101
      %s105 = sphi 0, %s104
      %s121 = sphi 0, %s105
      %s125 = sphi 0, %s125
      %s127 = sphi 0, %s125
      %s128 = sphi 0, %s127
      %s142 = sphi 0, %s128
      %s146 = sphi 0, %s146
      %s148 = sphi 0, %s146
      %s149 = sphi 0, %s148
      %s163 = sphi 0, %s149
      %s167 = sphi 0, %s167
      %s169 = sphi 0, %s167
      %s170 = sphi 0, %s169
      %s184 = sphi 0, %s170
      %s188 = sphi 0, %s188
      %s190 = sphi 0, %s188
      %s191 = sphi 0, %s190
      %s205 = sphi 0, %s191
      %s213 = sphi 0, %s215
      %s216 = sphi 0, %s213
      %s217 = sphi 0, %s216
      %s233 = sphi 0, %s217
    $region4: #{tpu_custom_call.1} parent=1 // loop_header_branch
      %26 = sbr.rel (%p24) target = $region8
    $region5: #{tpu_custom_call.1} parent=1 // loop_body
      %s28 = ssub.s32 %s23, 1
      %s29 = ssub.s32 %s23, 2
      %s36 = sadd.s32 1, %s31
      %p37 = scmp.ge.s32.totalorder %s36, 1
      %s38 = scalar_select %p37, 0, %s36
      %s39 = sadd.s32 1, %s30
      %s40 = scalar_select %p37, %s39, %s30
      %p41 = scmp.ge.s32.totalorder %s40, 2
      %s42 = scalar_select %p41, 0, %s40
      %s43 = ssub.s32 %s30, %s42
      %s44 = ssub.s32 %s31, %s38
      %s45 = sor.u32 %s43, %s44
      %p46 = scmp.eq.s32.totalorder %s45, 0
      %s48 = sadd.s32 %s47, 1
      %s49 = scalar_select %p46, %s47, %s48
      %p52 = pneg %p46
      %p53 = scmp.eq.s32.totalorder %s23, 1
      %p54 = por %p52, %p53
      %p55 = scmp.ne.s32.totalorder %s47, %s50
      %p56 = scmp.eq.s32.totalorder %s23, 0
      %p57 = por %p55, %p56
      %p58 = scmp.ne.s32.totalorder %s47, %s50
      %p59 = scmp.eq.s32.totalorder %s28, 1
      %p60 = por %p58, %p59
      %p61 = scmp.ne.s32.totalorder %s50, %s51
      %p62 = scmp.eq.s32.totalorder %s28, 0
      %p63 = por %p61, %p62
      %p64 = scmp.ne.s32.totalorder %s50, %s51
      %p65 = scmp.eq.s32.totalorder %s29, 1
      %p66 = por %p64, %p65
      %p68 = scmp.ne.s32.totalorder %s51, %s67
      %p69 = scmp.eq.s32.totalorder %s29, 0
      %p70 = por %p68, %p69
      %s71 = ssub.s32 %s30, %s42
      %s72 = ssub.s32 %s31, %s38
      %s73 = sor.u32 %s71, %s72
      %p74 = scmp.eq.s32.totalorder %s73, 0
      %s76 = sadd.s32 %s75, 1
      %s77 = scalar_select %p74, %s75, %s76
      %p80 = pneg %p74
      %p81 = scmp.eq.s32.totalorder %s23, 1
      %p82 = por %p80, %p81
      %p83 = scmp.ne.s32.totalorder %s75, %s78
      %p84 = scmp.eq.s32.totalorder %s23, 0
      %p85 = por %p83, %p84
      %p86 = scmp.ne.s32.totalorder %s75, %s78
      %p87 = scmp.eq.s32.totalorder %s28, 1
      %p88 = por %p86, %p87
      %p89 = scmp.ne.s32.totalorder %s78, %s79
      %p90 = scmp.eq.s32.totalorder %s28, 0
      %p91 = por %p89, %p90
      %p92 = scmp.ne.s32.totalorder %s78, %s79
      %p93 = scmp.eq.s32.totalorder %s29, 1
      %p94 = por %p92, %p93
      %p96 = scmp.ne.s32.totalorder %s79, %s95
      %p97 = scmp.eq.s32.totalorder %s29, 0
      %p98 = por %p96, %p97
      %s99 = ssub.s32 %s30, %s42
      %p100 = scmp.eq.s32.totalorder %s99, 0
      %s102 = sadd.s32 %s101, 1
      %s103 = scalar_select %p100, %s101, %s102
      %p106 = pneg %p100
      %p107 = scmp.eq.s32.totalorder %s23, 1
      %p108 = por %p106, %p107
      %p109 = scmp.ne.s32.totalorder %s101, %s104
      %p110 = scmp.eq.s32.totalorder %s23, 0
      %p111 = por %p109, %p110
      %p112 = scmp.ne.s32.totalorder %s101, %s104
      %p113 = scmp.eq.s32.totalorder %s28, 1
      %p114 = por %p112, %p113
      %p115 = scmp.ne.s32.totalorder %s104, %s105
      %p116 = scmp.eq.s32.totalorder %s28, 0
      %p117 = por %p115, %p116
      %p118 = scmp.ne.s32.totalorder %s104, %s105
      %p119 = scmp.eq.s32.totalorder %s29, 1
      %p120 = por %p118, %p119
      %p122 = scmp.ne.s32.totalorder %s105, %s121
      %p123 = scmp.eq.s32.totalorder %s29, 0
      %p124 = por %p122, %p123
      %s126 = sadd.s32 %s125, 1
      %p129 = scmp.eq.s32.totalorder %s23, 1
      %p130 = scmp.ne.s32.totalorder %s125, %s127
      %p131 = scmp.eq.s32.totalorder %s23, 0
      %p132 = por %p130, %p131
      %p133 = scmp.ne.s32.totalorder %s125, %s127
      %p134 = scmp.eq.s32.totalorder %s28, 1
      %p135 = por %p133, %p134
      %p136 = scmp.ne.s32.totalorder %s127, %s128
      %p137 = scmp.eq.s32.totalorder %s28, 0
      %p138 = por %p136, %p137
      %p139 = scmp.ne.s32.totalorder %s127, %s128
      %p140 = scmp.eq.s32.totalorder %s29, 1
      %p141 = por %p139, %p140
      %p143 = scmp.ne.s32.totalorder %s128, %s142
      %p144 = scmp.eq.s32.totalorder %s29, 0
      %p145 = por %p143, %p144
      %s147 = sadd.s32 %s146, 1
      %p150 = scmp.eq.s32.totalorder %s23, 1
      %p151 = scmp.ne.s32.totalorder %s146, %s148
      %p152 = scmp.eq.s32.totalorder %s23, 0
      %p153 = por %p151, %p152
      %p154 = scmp.ne.s32.totalorder %s146, %s148
      %p155 = scmp.eq.s32.totalorder %s28, 1
      %p156 = por %p154, %p155
      %p157 = scmp.ne.s32.totalorder %s148, %s149
      %p158 = scmp.eq.s32.totalorder %s28, 0
      %p159 = por %p157, %p158
      %p160 = scmp.ne.s32.totalorder %s148, %s149
      %p161 = scmp.eq.s32.totalorder %s29, 1
      %p162 = por %p160, %p161
      %p164 = scmp.ne.s32.totalorder %s149, %s163
      %p165 = scmp.eq.s32.totalorder %s29, 0
      %p166 = por %p164, %p165
      %s168 = sadd.s32 %s167, 1
      %p171 = scmp.eq.s32.totalorder %s23, 1
      %p172 = scmp.ne.s32.totalorder %s167, %s169
      %p173 = scmp.eq.s32.totalorder %s23, 0
      %p174 = por %p172, %p173
      %p175 = scmp.ne.s32.totalorder %s167, %s169
      %p176 = scmp.eq.s32.totalorder %s28, 1
      %p177 = por %p175, %p176
      %p178 = scmp.ne.s32.totalorder %s169, %s170
      %p179 = scmp.eq.s32.totalorder %s28, 0
      %p180 = por %p178, %p179
      %p181 = scmp.ne.s32.totalorder %s169, %s170
      %p182 = scmp.eq.s32.totalorder %s29, 1
      %p183 = por %p181, %p182
      %p185 = scmp.ne.s32.totalorder %s170, %s184
      %p186 = scmp.eq.s32.totalorder %s29, 0
      %p187 = por %p185, %p186
      %s189 = sadd.s32 %s188, 1
      %p192 = scmp.eq.s32.totalorder %s23, 1
      %p193 = scmp.ne.s32.totalorder %s188, %s190
      %p194 = scmp.eq.s32.totalorder %s23, 0
      %p195 = por %p193, %p194
      %p196 = scmp.ne.s32.totalorder %s188, %s190
      %p197 = scmp.eq.s32.totalorder %s28, 1
      %p198 = por %p196, %p197
      %p199 = scmp.ne.s32.totalorder %s190, %s191
      %p200 = scmp.eq.s32.totalorder %s28, 0
      %p201 = por %p199, %p200
      %p202 = scmp.ne.s32.totalorder %s190, %s191
      %p203 = scmp.eq.s32.totalorder %s29, 1
      %p204 = por %p202, %p203
      %p206 = scmp.ne.s32.totalorder %s191, %s205
      %p207 = scmp.eq.s32.totalorder %s29, 0
      %p208 = por %p206, %p207
      %s209 = ssub.s32 %s30, %s42
      %s210 = ssub.s32 %s31, %s38
      %s211 = sor.u32 %s209, %s210
      %p212 = scmp.eq.s32.totalorder %s211, 0
      %s214 = sadd.s32 %s213, 1
      %s215 = scalar_select %p212, %s213, %s214
      %p218 = pneg %p212
      %p219 = scmp.eq.s32.totalorder %s23, 1
      %p220 = por %p218, %p219
      %p221 = scmp.ne.s32.totalorder %s213, %s216
      %p222 = scmp.eq.s32.totalorder %s23, 0
      %p223 = por %p221, %p222
      %p224 = scmp.ne.s32.totalorder %s213, %s216
      %p225 = scmp.eq.s32.totalorder %s28, 1
      %p226 = por %p224, %p225
      %p227 = scmp.ne.s32.totalorder %s216, %s217
      %p228 = scmp.eq.s32.totalorder %s28, 0
      %p229 = por %p227, %p228
      %p230 = scmp.ne.s32.totalorder %s216, %s217
      %p231 = scmp.eq.s32.totalorder %s29, 1
      %p232 = por %p230, %p231
      %p234 = scmp.ne.s32.totalorder %s217, %s233
      %p235 = scmp.eq.s32.totalorder %s29, 0
      %p236 = por %p234, %p235
      %p237 = scmp.le.s32.totalorder 1, %s23
      %p238 = scmp.lt.s32.totalorder %s23, 3
      %p239 = pnand %p237, %p238
      %p240 = pneg %p239
      // Predicated region
      $region9: #{tpu_custom_call.1} parent=5 // pred_check
        _
      $region10: #{tpu_custom_call.1} parent=5 // pred_check_branch
        %242 = sbr.rel (%p239) target = $region12
      $region11: #{tpu_custom_call.1} parent=5 // pred_region
        %s243 = ssub.s32 %s23, 1
        // Predicated region
        $region13: #{tpu_custom_call.1} parent=11 // pred_check
          %p244 = pneg %p138
        $region14: #{tpu_custom_call.1} parent=11 // pred_check_branch
          %246 = sbr.rel (%p244) target = $region16
        $region15: #{tpu_custom_call.1} parent=11 // pred_region
          %s248 = ssub.s32 512, 512
          %249 = vsyncadd [#allocation6], %s248
          %s250 = sshll.u32 [#allocation7], 4
          %s251 = int_to_ptr.vmem [resolvable:$true] %s250
          %256 = dma.hbm_to_vmem [thread:$0]  %s3, 512, %s251, [#allocation6], 128, 128, 8
        $region16: #{tpu_custom_call.1} parent=11 // pred_fallthru
          _
        // Predicated region
        $region17: #{tpu_custom_call.1} parent=11 // pred_check
          %p257 = pneg %p159
        $region18: #{tpu_custom_call.1} parent=11 // pred_check_branch
          %259 = sbr.rel (%p257) target = $region20
        $region19: #{tpu_custom_call.1} parent=11 // pred_region
          %s261 = ssub.s32 512, 512
          %262 = vsyncadd [#allocation9], %s261
          %s263 = sshll.u32 [#allocation8], 4
          %s264 = int_to_ptr.vmem [resolvable:$true] %s263
          %269 = dma.hbm_to_vmem [thread:$0]  %s4, 512, %s264, [#allocation9], 128, 128, 8
        $region20: #{tpu_custom_call.1} parent=11 // pred_fallthru
          _
        // Predicated region
        $region21: #{tpu_custom_call.1} parent=11 // pred_check
          %p270 = pneg %p180
        $region22: #{tpu_custom_call.1} parent=11 // pred_check_branch
          %272 = sbr.rel (%p270) target = $region24
        $region23: #{tpu_custom_call.1} parent=11 // pred_region
          %s274 = ssub.s32 512, 512
          %275 = vsyncadd [#allocation9], %s274
          %s276 = sshll.u32 [#allocation10], 4
          %s277 = int_to_ptr.vmem [resolvable:$true] %s276
          %282 = dma.hbm_to_vmem [thread:$0]  %s5, 512, %s277, [#allocation9], 128, 128, 8
        $region24: #{tpu_custom_call.1} parent=11 // pred_fallthru
          _
        // Predicated region
        $region25: #{tpu_custom_call.1} parent=11 // pred_check
          %p283 = pneg %p201
        $region26: #{tpu_custom_call.1} parent=11 // pred_check_branch
          %285 = sbr.rel (%p283) target = $region28
        $region27: #{tpu_custom_call.1} parent=11 // pred_region
          _
        $region28: #{tpu_custom_call.1} parent=11 // pred_fallthru
          _
      $region12: #{tpu_custom_call.1} parent=5 // pred_fallthru
        _
      %p286 = scmp.lt.s32.totalorder %s23, 2
      // Predicated region
      $region29: #{tpu_custom_call.1} parent=5 // pred_check
        %p287 = pneg %p286
      $region30: #{tpu_custom_call.1} parent=5 // pred_check_branch
        %289 = sbr.rel (%p287) target = $region32
      $region31: #{tpu_custom_call.1} parent=5 // pred_region
        // Predicated region
        $region33: #{tpu_custom_call.1} parent=31 // pred_check
          %p290 = pneg %p57
        $region34: #{tpu_custom_call.1} parent=31 // pred_check_branch
          %292 = sbr.rel (%p290) target = $region36
        $region35: #{tpu_custom_call.1} parent=31 // pred_region
          %s293 = sand.u32 %s47, 1
          %s294 = scalar_lea.sflag [#allocation3], %s293
          %s295 = sand.u32 %s47, 1
          %s296 = smul.addr %s295, 8
          %s297 = scalar_lea.vmem [#allocation2], %s296
          %s299 = ssub.s32 128, 128
          %300 = vsyncadd %s294, %s299
          %s301 = sadd.s32 %s31, %s30
          %s302 = smul.addr %s301, 128
          %s303 = scalar_lea.hbm %s0, %s302
          %s305 = sshll.u32 %s297, 4
          %s306 = int_to_ptr.vmem [resolvable:$true] %s305
          %308 = dma.hbm_to_vmem [thread:$0]  %s303, 128, %s306, %s294
        $region36: #{tpu_custom_call.1} parent=31 // pred_fallthru
          _
        // Predicated region
        $region37: #{tpu_custom_call.1} parent=31 // pred_check
          %p309 = pneg %p85
        $region38: #{tpu_custom_call.1} parent=31 // pred_check_branch
          %311 = sbr.rel (%p309) target = $region40
        $region39: #{tpu_custom_call.1} parent=31 // pred_region
          %s312 = sand.u32 %s23, 1
          %s313 = scalar_lea.sflag [#allocation6], %s312
          %s314 = sand.u32 %s75, 1
          %s315 = smul.addr %s314, 8
          %s316 = scalar_lea.vmem [#allocation5], %s315
          %s318 = ssub.s32 128, 128
          %319 = vsyncadd %s313, %s318
          %s320 = sadd.s32 %s31, %s30
          %s321 = smul.addr %s320, 128
          %s322 = scalar_lea.hbm %s1, %s321
          %s324 = sshll.u32 %s316, 4
          %s325 = int_to_ptr.vmem [resolvable:$true] %s324
          %327 = dma.hbm_to_vmem [thread:$0]  %s322, 128, %s325, %s313
        $region40: #{tpu_custom_call.1} parent=31 // pred_fallthru
          _
        // Predicated region
        $region41: #{tpu_custom_call.1} parent=31 // pred_check
          %p328 = pneg %p111
        $region42: #{tpu_custom_call.1} parent=31 // pred_check_branch
          %330 = sbr.rel (%p328) target = $region44
        $region43: #{tpu_custom_call.1} parent=31 // pred_region
          %p331 = scmp.lt.s32.totalorder %s30, 1
          %s332 = scalar_select %p331, %s30, 1
          %s333 = scalar_lea.vmem %s2, %s332
        $region44: #{tpu_custom_call.1} parent=31 // pred_fallthru
          _
      $region32: #{tpu_custom_call.1} parent=5 // pred_fallthru
        _
      %p334 = scmp.le.s32.totalorder 1, %s23
      %p335 = scmp.lt.s32.totalorder %s23, 3
      %p336 = pnand %p334, %p335
      %p337 = pneg %p336
      // Predicated region
      $region45: #{tpu_custom_call.1} parent=5 // pred_check
        _
      $region46: #{tpu_custom_call.1} parent=5 // pred_check_branch
        %339 = sbr.rel (%p336) target = $region48
      $region47: #{tpu_custom_call.1} parent=5 // pred_region
        %s340 = ssub.s32 %s23, 1
        %s341 = sand.u32 %s50, 1
        %s342 = scalar_lea.sflag [#allocation3], %s341
        %s343 = sand.u32 %s50, 1
        %s344 = smul.addr %s343, 8
        %s345 = scalar_lea.vmem [#allocation2], %s344
        // Predicated region
        $region49: #{tpu_custom_call.1} parent=47 // pred_check
          %p346 = pneg %p63
        $region50: #{tpu_custom_call.1} parent=47 // pred_check_branch
          %348 = sbr.rel (%p346) target = $region52
        $region51: #{tpu_custom_call.1} parent=47 // pred_region
          %349 = dma.done %s342, 128
        $region52: #{tpu_custom_call.1} parent=47 // pred_fallthru
          _
        %s350 = sand.u32 %s28, 1
        %s351 = scalar_lea.sflag [#allocation6], %s350
        %s352 = sand.u32 %s78, 1
        %s353 = smul.addr %s352, 8
        %s354 = scalar_lea.vmem [#allocation5], %s353
        // Predicated region
        $region53: #{tpu_custom_call.1} parent=47 // pred_check
          %p355 = pneg %p91
        $region54: #{tpu_custom_call.1} parent=47 // pred_check_branch
          %357 = sbr.rel (%p355) target = $region56
        $region55: #{tpu_custom_call.1} parent=47 // pred_region
          %358 = dma.done %s351, 128
        $region56: #{tpu_custom_call.1} parent=47 // pred_fallthru
          _
        // Predicated region
        $region57: #{tpu_custom_call.1} parent=47 // pred_check
          %p359 = pneg %p138
        $region58: #{tpu_custom_call.1} parent=47 // pred_check_branch
          %361 = sbr.rel (%p359) target = $region60
        $region59: #{tpu_custom_call.1} parent=47 // pred_region
          %362 = dma.done [#allocation6], 512
        $region60: #{tpu_custom_call.1} parent=47 // pred_fallthru
          _
        // Predicated region
        $region61: #{tpu_custom_call.1} parent=47 // pred_check
          %p363 = pneg %p159
        $region62: #{tpu_custom_call.1} parent=47 // pred_check_branch
          %365 = sbr.rel (%p363) target = $region64
        $region63: #{tpu_custom_call.1} parent=47 // pred_region
          %366 = dma.done [#allocation9], 512
        $region64: #{tpu_custom_call.1} parent=47 // pred_fallthru
          _
        // Predicated region
        $region65: #{tpu_custom_call.1} parent=47 // pred_check
          %p367 = pneg %p180
        $region66: #{tpu_custom_call.1} parent=47 // pred_check_branch
          %369 = sbr.rel (%p367) target = $region68
        $region67: #{tpu_custom_call.1} parent=47 // pred_region
          %370 = dma.done [#allocation9], 512
        $region68: #{tpu_custom_call.1} parent=47 // pred_fallthru
          _
        %s371 = sand.u32 %s50, 1
        %s372 = scalar_lea.sflag [#allocation3], %s371
        %s373 = sand.u32 %s50, 1
        %s374 = smul.addr %s373, 8
        %s375 = scalar_lea.vmem [#allocation2], %s374
        %p376 = pneg %p63
        %p377 = pneg %p60
        %s378 = sand.u32 %s28, 1
        %s379 = scalar_lea.sflag [#allocation6], %s378
        %s380 = sand.u32 %s78, 1
        %s381 = smul.addr %s380, 8
        %s382 = scalar_lea.vmem [#allocation5], %s381
        %p383 = pneg %p91
        %p384 = pneg %p88
        %p385 = scmp.lt.s32.totalorder %s32, 1
        %s386 = scalar_select %p385, %s32, 1
        %s387 = scalar_lea.vmem %s2, %s386
        %p388 = pneg %p117
        %p389 = pneg %p114
        %p390 = pneg %p138
        %p391 = pneg %p135
        %p392 = pneg %p159
        %p393 = pneg %p156
        %p394 = pneg %p180
        %p395 = pneg %p177
        %p396 = pneg %p201
        %p397 = pneg %p198
        %p398 = pneg %p229
        %p399 = pneg %p226
        %s400 = sand.u32 %s216, 1
        %s401 = scalar_lea.sflag [#allocation4], %s400
        %s402 = sand.u32 %s216, 1
        %s403 = smul.addr %s402, 8
        %s404 = scalar_lea.vmem [#allocation11], %s403
        %p405 = scmp.lt.s32.totalorder %s32, 1
        %s406 = scalar_select %p405, %s32, 1
        %s407 = scalar_lea.vmem %s2, %s406
        %v408 = vld [vmem:[%s345] sm:$0xff]
        %v409 = vld [vmem:[#allocation7] sm:$0xff]
        %v410 = vld [vmem:[#allocation7 + $0x8] sm:$0xff]
        %v411 = vld [vmem:[#allocation7 + $0x10] sm:$0xff]
        %v412 = vld [vmem:[#allocation7 + $0x18] sm:$0xff]
        %v413 = vld [vmem:[%s354] sm:$0xff]
        %v414 = vld [vmem:[#allocation8] sm:$0xff]
        %v415 = vld [vmem:[#allocation8 + $0x8] sm:$0xff]
        %v416 = vld [vmem:[#allocation8 + $0x10] sm:$0xff]
        %v417 = vld [vmem:[#allocation8 + $0x18] sm:$0xff]
        %vm418 = vcmask 261120
        %v420 = vsel %vm418, %v413, 0
        %422 = vmatprep.subr.mxu0 0.0
        %423 = vmatpush1.msra.mxu0 %v414
        %424 = vmatprep.subr.mxu0 0.0
        %425 = vmatpush1.msra.mxu0 %v415
        %426 = vmatprep.subr.mxu0 0.0
        %427 = vmatpush1.msra.mxu0 %v416
        %428 = vmatprep.subr.mxu0 0.0
        %429 = vmatpush1.msra.mxu0 %v417
        %430 = vmatprep.subr.mxu0 0.0
        %431 = vmatpush1.msra.mxu0 0.0
        %432 = vmatprep.subr.mxu0 0.0
        %433 = vmatpush1.msra.mxu0 0.0
        %434 = vmatprep.subr.mxu0 0.0
        %435 = vmatpush1.msra.mxu0 0.0
        %436 = vmatprep.subr.mxu0 0.0
        %437 = vmatpush1.msra.mxu0 0.0
        %438 = vmatprep.subr.mxu0 0.0
        %439 = vmatpush1.msra.mxu0 0.0
        %440 = vmatprep.subr.mxu0 0.0
        %441 = vmatpush1.msra.mxu0 0.0
        %442 = vmatprep.subr.mxu0 0.0
        %443 = vmatpush1.msra.mxu0 0.0
        %444 = vmatprep.subr.mxu0 0.0
        %445 = vmatpush1.msra.mxu0 0.0
        %446 = vmatprep.subr.mxu0 0.0
        %447 = vmatpush1.msra.mxu0 0.0
        %448 = vmatprep.subr.mxu0 0.0
        %449 = vmatpush1.msra.mxu0 0.0
        %450 = vmatprep.subr.mxu0 0.0
        %451 = vmatpush1.msra.mxu0 0.0
        %452 = vmatprep.subr.mxu0 0.0
        %453 = vmatpush1.msra.mxu0 0.0
        %454 = vmatprep.subr.mxu0 0.0
        %455 = vmatpush1.msra.mxu0 0.0
        %456 = vmatprep.subr.mxu0 0.0
        %457 = vmatpush1.msra.mxu0 0.0
        %458 = vmatprep.subr.mxu0 0.0
        %459 = vmatpush1.msra.mxu0 0.0
        %460 = vmatprep.subr.mxu0 0.0
        %461 = vmatpush1.msra.mxu0 0.0
        %462 = vmatprep.subr.mxu0 0.0
        %463 = vmatpush1.msra.mxu0 0.0
        %464 = vmatprep.subr.mxu0 0.0
        %465 = vmatpush1.msra.mxu0 0.0
        %466 = vmatprep.subr.mxu0 0.0
        %467 = vmatpush1.msra.mxu0 0.0
        %468 = vmatprep.subr.mxu0 0.0
        %469 = vmatpush1.msra.mxu0 0.0
        %470 = vmatprep.subr.mxu0 0.0
        %471 = vmatpush1.msra.mxu0 0.0
        %472 = vmatprep.subr.mxu0 0.0
        %473 = vmatpush1.msra.mxu0 0.0
        %474 = vmatprep.subr.mxu0 0.0
        %475 = vmatpush1.msra.mxu0 0.0
        %476 = vmatprep.subr.mxu0 0.0
        %477 = vmatpush1.msra.mxu0 0.0
        %478 = vmatprep.subr.mxu0 0.0
        %479 = vmatpush1.msra.mxu0 0.0
        %480 = vmatprep.subr.mxu0 0.0
        %481 = vmatpush1.msra.mxu0 0.0
        %482 = vmatprep.subr.mxu0 0.0
        %483 = vmatpush1.msra.mxu0 0.0
        %484 = vmatprep.subr.mxu0 0.0
        %485 = vmatpush1.msra.mxu0 0.0
        %486 = vmatprep.mubr.f32.mxu0 0.0
        %487 = vmatmul.mubr.f32.gmra.mrb[0].mxu0 %v420
        %v488 = vpop.f32.mrb[0].mxu0
        %v489 = vadd.f32 0.0, %v488
        %v490 = vpop.f32.mrb[0].mxu0
        %491 = vdwg.mxu0
        %v493 = vsel %vm418, %v408, 0
        %495 = vmatprep.subr.mxu0 0.0
        %496 = vmatpush1.msra.mxu0 %v409
        %497 = vmatprep.subr.mxu0 0.0
        %498 = vmatpush1.msra.mxu0 %v410
        %499 = vmatprep.subr.mxu0 0.0
        %500 = vmatpush1.msra.mxu0 %v411
        %501 = vmatprep.subr.mxu0 0.0
        %502 = vmatpush1.msra.mxu0 %v412
        %503 = vmatprep.subr.mxu0 0.0
        %504 = vmatpush1.msra.mxu0 0.0
        %505 = vmatprep.subr.mxu0 0.0
        %506 = vmatpush1.msra.mxu0 0.0
        %507 = vmatprep.subr.mxu0 0.0
        %508 = vmatpush1.msra.mxu0 0.0
        %509 = vmatprep.subr.mxu0 0.0
        %510 = vmatpush1.msra.mxu0 0.0
        %511 = vmatprep.subr.mxu0 0.0
        %512 = vmatpush1.msra.mxu0 0.0
        %513 = vmatprep.subr.mxu0 0.0
        %514 = vmatpush1.msra.mxu0 0.0
        %515 = vmatprep.subr.mxu0 0.0
        %516 = vmatpush1.msra.mxu0 0.0
        %517 = vmatprep.subr.mxu0 0.0
        %518 = vmatpush1.msra.mxu0 0.0
        %519 = vmatprep.subr.mxu0 0.0
        %520 = vmatpush1.msra.mxu0 0.0
        %521 = vmatprep.subr.mxu0 0.0
        %522 = vmatpush1.msra.mxu0 0.0
        %523 = vmatprep.subr.mxu0 0.0
        %524 = vmatpush1.msra.mxu0 0.0
        %525 = vmatprep.subr.mxu0 0.0
        %526 = vmatpush1.msra.mxu0 0.0
        %527 = vmatprep.subr.mxu0 0.0
        %528 = vmatpush1.msra.mxu0 0.0
        %529 = vmatprep.subr.mxu0 0.0
        %530 = vmatpush1.msra.mxu0 0.0
        %531 = vmatprep.subr.mxu0 0.0
        %532 = vmatpush1.msra.mxu0 0.0
        %533 = vmatprep.subr.mxu0 0.0
        %534 = vmatpush1.msra.mxu0 0.0
        %535 = vmatprep.subr.mxu0 0.0
        %536 = vmatpush1.msra.mxu0 0.0
        %537 = vmatprep.subr.mxu0 0.0
        %538 = vmatpush1.msra.mxu0 0.0
        %539 = vmatprep.subr.mxu0 0.0
        %540 = vmatpush1.msra.mxu0 0.0
        %541 = vmatprep.subr.mxu0 0.0
        %542 = vmatpush1.msra.mxu0 0.0
        %543 = vmatprep.subr.mxu0 0.0
        %544 = vmatpush1.msra.mxu0 0.0
        %545 = vmatprep.subr.mxu0 0.0
        %546 = vmatpush1.msra.mxu0 0.0
        %547 = vmatprep.subr.mxu0 0.0
        %548 = vmatpush1.msra.mxu0 0.0
        %549 = vmatprep.subr.mxu0 0.0
        %550 = vmatpush1.msra.mxu0 0.0
        %551 = vmatprep.subr.mxu0 0.0
        %552 = vmatpush1.msra.mxu0 0.0
        %553 = vmatprep.subr.mxu0 0.0
        %554 = vmatpush1.msra.mxu0 0.0
        %555 = vmatprep.subr.mxu0 0.0
        %556 = vmatpush1.msra.mxu0 0.0
        %557 = vmatprep.subr.mxu0 0.0
        %558 = vmatpush1.msra.mxu0 0.0
        %559 = vmatprep.mubr.f32.mxu0 0.0
        %560 = vmatmul.mubr.f32.gmra.mrb[0].mxu0 %v493
        %v561 = vpop.f32.mrb[0].mxu0
        %v562 = vadd.f32 %v489, %v561
        %v563 = vpop.f32.mrb[0].mxu0
        %564 = vdwg.mxu0
        %v565 = vld [vmem:[%s407] sm:$0x1]
        %v567 = vlaneseq
        %v568 = vshrl.u32 %v567, 7
        %v569 = vsub.s32 0, %v568
        %v570 = vrot.slane %v565, %v569
        %v572 = vadd.f32 %v562, %v570
        %v573 = vmul.f32 %v572, 0.5
        %v574 = vmul.f32 %v572, 0.70710677
        %v575 = vand.u32 2147483647, %v574
        %v576 = vmul.f32 %v575, 0.3275911
        %v577 = vadd.f32 %v576, 1.0
        %v578 = vrcp.pop %v577
        %v579 = vmul.f32 1.0, %v578
        %v580 = vmul.f32 %v579, 1.0614054
        %v581 = vadd.f32 %v580, -1.4531521
        %v582 = vmul.f32 %v579, %v581
        %v583 = vadd.f32 %v582, 1.4214138
        %v584 = vmul.f32 %v579, %v583
        %v585 = vadd.f32 %v584, -0.28449672
        %v586 = vmul.f32 %v579, %v585
        %v587 = vadd.f32 %v586, 0.2548296
        %v588 = vmul.f32 %v579, %v587
        %v589 = vsub.f32 0.0, %v575
        %v590 = vmul.f32 %v589, %v575
        %v591 = vmul.f32 %v590, 1.442695
        %v592 = vpow.pop %v591
        %v593 = vmul.f32 %v588, %v592
        %v594 = vsub.f32 1.0, %v593
        %vm595 = vcmp.ge.f32.partialorder %v574, 0.0
        %v596 = vsub.f32 0.0, %v594
        %v597 = vsel %vm595, %v594, %v596
        %v598 = vadd.f32 %v597, 1.0
        %v599 = vmul.f32 %v573, %v598
        %v600 = vld [vmem:[#allocation10] sm:$0xff]
        %v601 = vld [vmem:[#allocation10 + $0x8] sm:$0xff]
        %v602 = vld [vmem:[#allocation10 + $0x10] sm:$0xff]
        %v603 = vld [vmem:[#allocation10 + $0x18] sm:$0xff]
        %v604 = vld [vmem:[%s6] sm:$0x1]
        %v606 = vlaneseq
        %v607 = vshrl.u32 %v606, 7
        %v608 = vsub.s32 0, %v607
        %v609 = vrot.slane %v604, %v608
        %v612 = vsel %vm418, %v599, 0
        %614 = vmatprep.subr.mxu0 0.0
        %615 = vmatpush1.msra.mxu0 %v600
        %616 = vmatprep.subr.mxu0 0.0
        %617 = vmatpush1.msra.mxu0 %v601
        %618 = vmatprep.subr.mxu0 0.0
        %619 = vmatpush1.msra.mxu0 %v602
        %620 = vmatprep.subr.mxu0 0.0
        %621 = vmatpush1.msra.mxu0 %v603
        %622 = vmatprep.subr.mxu0 0.0
        %623 = vmatpush1.msra.mxu0 0.0
        %624 = vmatprep.subr.mxu0 0.0
        %625 = vmatpush1.msra.mxu0 0.0
        %626 = vmatprep.subr.mxu0 0.0
        %627 = vmatpush1.msra.mxu0 0.0
        %628 = vmatprep.subr.mxu0 0.0
        %629 = vmatpush1.msra.mxu0 0.0
        %630 = vmatprep.subr.mxu0 0.0
        %631 = vmatpush1.msra.mxu0 0.0
        %632 = vmatprep.subr.mxu0 0.0
        %633 = vmatpush1.msra.mxu0 0.0
        %634 = vmatprep.subr.mxu0 0.0
        %635 = vmatpush1.msra.mxu0 0.0
        %636 = vmatprep.subr.mxu0 0.0
        %637 = vmatpush1.msra.mxu0 0.0
        %638 = vmatprep.subr.mxu0 0.0
        %639 = vmatpush1.msra.mxu0 0.0
        %640 = vmatprep.subr.mxu0 0.0
        %641 = vmatpush1.msra.mxu0 0.0
        %642 = vmatprep.subr.mxu0 0.0
        %643 = vmatpush1.msra.mxu0 0.0
        %644 = vmatprep.subr.mxu0 0.0
        %645 = vmatpush1.msra.mxu0 0.0
        %646 = vmatprep.subr.mxu0 0.0
        %647 = vmatpush1.msra.mxu0 0.0
        %648 = vmatprep.subr.mxu0 0.0
        %649 = vmatpush1.msra.mxu0 0.0
        %650 = vmatprep.subr.mxu0 0.0
        %651 = vmatpush1.msra.mxu0 0.0
        %652 = vmatprep.subr.mxu0 0.0
        %653 = vmatpush1.msra.mxu0 0.0
        %654 = vmatprep.subr.mxu0 0.0
        %655 = vmatpush1.msra.mxu0 0.0
        %656 = vmatprep.subr.mxu0 0.0
        %657 = vmatpush1.msra.mxu0 0.0
        %658 = vmatprep.subr.mxu0 0.0
        %659 = vmatpush1.msra.mxu0 0.0
        %660 = vmatprep.subr.mxu0 0.0
        %661 = vmatpush1.msra.mxu0 0.0
        %662 = vmatprep.subr.mxu0 0.0
        %663 = vmatpush1.msra.mxu0 0.0
        %664 = vmatprep.subr.mxu0 0.0
        %665 = vmatpush1.msra.mxu0 0.0
        %666 = vmatprep.subr.mxu0 0.0
        %667 = vmatpush1.msra.mxu0 0.0
        %668 = vmatprep.subr.mxu0 0.0
        %669 = vmatpush1.msra.mxu0 0.0
        %670 = vmatprep.subr.mxu0 0.0
        %671 = vmatpush1.msra.mxu0 0.0
        %672 = vmatprep.subr.mxu0 0.0
        %673 = vmatpush1.msra.mxu0 0.0
        %674 = vmatprep.subr.mxu0 0.0
        %675 = vmatpush1.msra.mxu0 0.0
        %676 = vmatprep.subr.mxu0 0.0
        %677 = vmatpush1.msra.mxu0 0.0
        %678 = vmatprep.mubr.f32.mxu0 0.0
        %679 = vmatmul.mubr.f32.gmra.mrb[0].mxu0 %v612
        %v680 = vpop.f32.mrb[0].mxu0
        %v681 = vadd.f32 %v609, %v680
        %v682 = vpop.f32.mrb[0].mxu0
        %683 = vdwg.mxu0
        %v684 = vadd.f32 %v408, %v681
        %685 = vst.msk [vmem:[%s404] sm:$0xff] %vm418, %v684
        %s686 = sand.u32 %s216, 1
        %s687 = scalar_lea.sflag [#allocation4], %s686
        %s688 = sand.u32 %s216, 1
        %s689 = smul.addr %s688, 8
        %s690 = scalar_lea.vmem [#allocation11], %s689
        // Predicated region
        $region69: #{tpu_custom_call.1} parent=47 // pred_check
          %p691 = pneg %p226
        $region70: #{tpu_custom_call.1} parent=47 // pred_check_branch
          %693 = sbr.rel (%p691) target = $region72
        $region71: #{tpu_custom_call.1} parent=47 // pred_region
          %s695 = ssub.s32 128, 128
          %696 = vsyncadd %s687, %s695
          %s697 = sadd.s32 %s33, %s32
          %s698 = smul.addr %s697, 128
          %s699 = scalar_lea.hbm %s7, %s698
          %s701 = sshll.u32 %s690, 4
          %s702 = int_to_ptr.vmem [resolvable:$true] %s701
          %704 = dma.vmem_to_hbm [thread:$0]  %s702, 128, %s699, %s687
        $region72: #{tpu_custom_call.1} parent=47 // pred_fallthru
          _
      $region48: #{tpu_custom_call.1} parent=5 // pred_fallthru
        _
      %p705 = scmp.le.s32.totalorder 2, %s23
      // Predicated region
      $region73: #{tpu_custom_call.1} parent=5 // pred_check
        %p706 = pneg %p705
      $region74: #{tpu_custom_call.1} parent=5 // pred_check_branch
        %708 = sbr.rel (%p706) target = $region76
      $region75: #{tpu_custom_call.1} parent=5 // pred_region
        %s709 = ssub.s32 %s23, 2
        // Predicated region
        $region77: #{tpu_custom_call.1} parent=75 // pred_check
          %p710 = pneg %p232
        $region78: #{tpu_custom_call.1} parent=75 // pred_check_branch
          %712 = sbr.rel (%p710) target = $region80
        $region79: #{tpu_custom_call.1} parent=75 // pred_region
          %s713 = sand.u32 %s217, 1
          %s714 = scalar_lea.sflag [#allocation4], %s713
          %s715 = sand.u32 %s217, 1
          %s716 = smul.addr %s715, 8
          %s717 = scalar_lea.vmem [#allocation11], %s716
          %718 = dma.done %s714, 128
        $region80: #{tpu_custom_call.1} parent=75 // pred_fallthru
          _
      $region76: #{tpu_custom_call.1} parent=5 // pred_fallthru
        _
    $region6: #{tpu_custom_call.1} parent=1 // loop_footer
      %s27 = sadd.s32 1, %s23
    $region7: #{tpu_custom_call.1} parent=1 // loop_footer_branch
      %22 = sbr.rel target = $region3
    $region8: #{tpu_custom_call.1} parent=1 // loop_exit
      _
    %719 = vsyncpa [#allocation3], 1
    %s720 = scalar_lea.sflag [#allocation3], 1
    %721 = vsyncpa %s720, 1
    %722 = vsyncpa [#allocation6], 1
    %s723 = scalar_lea.sflag [#allocation6], 1
    %724 = vsyncpa %s723, 1
    %725 = vsyncpa [#allocation9], 1
    %726 = vsyncpa [#allocation4], 1
    %s727 = scalar_lea.sflag [#allocation4], 1
    %728 = vsyncpa %s727, 1

</llo_original>
